<compile_context>
chip_gen: v5e
topology: v5e:2x2
jax: 0.10.0
libtpu: 0.0.40
codegen_flags: <defaults>
</compile_context>

<pallas_src>
import functools

import jax
import jax.numpy as jnp
from jax.experimental import pallas as pl
from jax.experimental.pallas import tpu as pltpu

LANES = 128
SUBLANES = 8
# ~2 MiB per f32 block (4096*128*4B). Past the ~85%-of-roofline knee on all
# generations; double-buffered in+out (4x block) fits v5e's 16 MiB default
# scoped VMEM with headroom, and leaves plenty of room on v6e / v7x.
MAX_BLOCK_ROWS = 4096


def _gaussian_kernel(x_ref, o_ref, *, mu: float, scale: float):
    # Stream at native dtype; do the math in f32 inside the vregs (free relative
    # to HBM and safe on v5e's f32-only VPU/EUP). exp() lands on the EUP slot,
    # which co-issues with loads/stores -> kernel is purely HBM-bound.
    x = x_ref[...].astype(jnp.float32)
    d = x - mu
    o_ref[...] = jnp.exp(d * d * scale).astype(o_ref.dtype)


def gaussian_kernel(x, mu: float = 1.0, sigma: float = 1.0):
    """Elementwise exp(-0.5 * (x - mu)^2 / sigma^2), same shape/dtype as x.

    Note: sigma == 0 produces inf/NaN, matching the PyTorch reference behavior.
    """
    orig_shape = x.shape
    orig_dtype = x.dtype
    total = x.size

    # Fold -0.5 / sigma^2 into a single compile-time scalar: in-kernel work is
    # one sub + two muls per element, no divide, no scalar plumbing.
    scale = -0.5 / (float(sigma) * float(sigma))

    x_flat = jnp.ravel(x)
    # Only pad (tiny, <=127 elements) when the flat size isn't lane-aligned.
    lane_pad = (-total) % LANES
    if lane_pad:
        x_flat = jnp.pad(x_flat, (0, lane_pad))
    rows = x_flat.size // LANES
    x2d = x_flat.reshape(rows, LANES)

    # Block rows: as large as possible up to MAX_BLOCK_ROWS, multiple of 8.
    block_rows = min(MAX_BLOCK_ROWS, pl.cdiv(rows, SUBLANES) * SUBLANES)
    grid = (pl.cdiv(rows, block_rows),)

    itemsize = jnp.dtype(orig_dtype).itemsize
    cost = pl.CostEstimate(
        flops=3 * total,
        transcendentals=total,
        bytes_accessed=2 * total * itemsize,
    )

    out2d = pl.pallas_call(
        functools.partial(_gaussian_kernel, mu=float(mu), scale=scale),
        out_shape=jax.ShapeDtypeStruct((rows, LANES), orig_dtype),
        grid=grid,
        in_specs=[pl.BlockSpec((block_rows, LANES), lambda i: (i, 0))],
        out_specs=pl.BlockSpec((block_rows, LANES), lambda i: (i, 0)),
        compiler_params=pltpu.CompilerParams(
            dimension_semantics=("parallel",),  # shards grid across TCs on v7x
        ),
        cost_estimate=cost,
    )(x2d)

    out_flat = out2d.reshape(-1)
    if lane_pad:
        out_flat = out_flat[:total]
    return out_flat.reshape(orig_shape)


if __name__ == "__main__":
    key = jax.random.PRNGKey(0)
    # Small NCHW input consistent with typical conv-style usage.
    x = jax.random.normal(key, (2, 4, 16, 16), dtype=jnp.float32)

    mu, sigma = 1.0, 1.0
    out = gaussian_kernel(x, mu=mu, sigma=sigma)
    out = jax.block_until_ready(out)

    # Reference check in plain JAX.
    ref = jnp.exp(-0.5 * (x - mu) ** 2 / sigma ** 2)
    assert out.shape == x.shape and out.dtype == x.dtype
    assert jnp.allclose(out, ref, atol=1e-6, rtol=1e-6)

    print("KERNEL_OK")
</pallas_src>

<mosaic_0001>
module attributes {stable_mosaic.version = 11 : i64} {
  func.func @_gaussian_kernel(%arg0: i32, %arg1: memref<16x128xf32, #tpu.memory_space<vmem>>, %arg2: memref<16x128xf32, #tpu.memory_space<vmem>>) attributes {dimension_semantics = [#tpu.dimension_semantics<parallel>], iteration_bounds = array<i64: 1>, scalar_prefetch = 0 : i64, scratch_operands = 0 : i64, tpu.core_type = #tpu.core_type<tc>, window_params = [{transform_indices = @transform_0, window_bounds = array<i64: 16, 128>}, {transform_indices = @transform_1, window_bounds = array<i64: 16, 128>}]} {
    %c0 = arith.constant 0 : index
    %c0_0 = arith.constant 0 : index
    %0 = vector.load %arg1[%c0, %c0_0] : memref<16x128xf32, #tpu.memory_space<vmem>>, vector<16x128xf32>
    %cst = arith.constant 1.000000e+00 : f32
    %1 = vector.broadcast %cst : f32 to vector<16x128xf32>
    %2 = arith.subf %0, %1 : vector<16x128xf32>
    %3 = arith.mulf %2, %2 : vector<16x128xf32>
    %cst_1 = arith.constant -5.000000e-01 : f32
    %4 = vector.broadcast %cst_1 : f32 to vector<16x128xf32>
    %5 = arith.mulf %3, %4 : vector<16x128xf32>
    %6 = math.exp %5 : vector<16x128xf32>
    %c0_2 = arith.constant 0 : index
    %c0_3 = arith.constant 0 : index
    %7 = vector.load %arg2[%c0_2, %c0_3] : memref<16x128xf32, #tpu.memory_space<vmem>>, vector<16x128xf32>
    tpu.vector_store %arg2[%c0_2, %c0_3], %6 {strides = array<i32>} : memref<16x128xf32, #tpu.memory_space<vmem>>, vector<16x128xf32>,
    return
  }
  func.func @transform_0(%arg0: i32) -> (i32, i32) {
    %c0_i32 = arith.constant 0 : i32
    %c0_i32_0 = arith.constant 0 : i32
    return %arg0, %c0_i32 : i32, i32
  }
  func.func @transform_1(%arg0: i32) -> (i32, i32) {
    %c0_i32 = arith.constant 0 : i32
    %c0_i32_0 = arith.constant 0 : i32
    return %arg0, %c0_i32 : i32, i32
  }
}

</mosaic_0001>

<llo_original>
// kernel: tpu_custom_call.1
$region0: #{tpu_custom_call.1}
  #allocation0 [shape = 'u32[]', space=smem, size = 0x4, offset = 0x4, fixed_abs, tag = 'smem constant byte address 0x4 - core index']
  #allocation1 [shape = 'u32[72,128]{1,0:T(1,128)}', space=vmem, size = 0x9000, scoped, tag = 'internal scratch']
  %s0 = inlined_call_operand.hbm [shape: f32[16,128], index: 0, kind: input, shape index: {}]
  %s1 = inlined_call_operand.hbm [shape: f32[16,128], index: 1, kind: output, shape index: {}]
  %s2 = sld [smem:[#allocation0]]
  $region18: #{tpu_custom_call.1} parent=0
    _
  %s4 = ssub.s32 1, %s2
  %s5 = scalar_select 0, %s4, %s2
  $region1: #{tpu_custom_call.1} parent=0
    #allocation2 [shape = 'u8[8192]{0}', space=vmem, size = 0x2000, scoped, tag = 'input window, operand 0, single buffered']
    #allocation3 [shape = 's32[1]{0}', space=sflag, size = 0x4, scoped, tag = 'scoped memory for tpu_custom_call.1']
    #allocation4 [shape = 's32[1]{0}', space=sflag, size = 0x4, scoped, tag = 'scoped memory for tpu_custom_call.1']
    #allocation5 [shape = 'u8[8192]{0}', space=vmem, size = 0x2000, scoped, tag = 'output window, operand 0, single buffered']
    %6 = vsyncpa [#allocation3], 0
    %7 = vsyncpa [#allocation4], 0
    // Predicated region
    $region2: #{tpu_custom_call.1} parent=1 // pred_check
      _
    $region3: #{tpu_custom_call.1} parent=1 // pred_check_branch
      %9 = sbr.rel (0) target = $region5
    $region4: #{tpu_custom_call.1} parent=1 // pred_region
      %11 = vsyncadd [#allocation3], 0
      %s12 = sshll.u32 %s0, 4
      %s13 = int_to_ptr.hbm [resolvable:$true] %s12
      %s14 = sshll.u32 [#allocation2], 4
      %s15 = int_to_ptr.vmem [resolvable:$true] %s14
      %20 = dma.hbm_to_vmem [thread:$0]  %s13, 256, %s15, [#allocation3], 128, 128, 8
    $region5: #{tpu_custom_call.1} parent=1 // pred_fallthru
      _
    // Predicated region
    $region6: #{tpu_custom_call.1} parent=1 // pred_check
      _
    $region7: #{tpu_custom_call.1} parent=1 // pred_check_branch
      %22 = sbr.rel (0) target = $region9
    $region8: #{tpu_custom_call.1} parent=1 // pred_region
      %24 = dma.done [#allocation3], 256
    $region9: #{tpu_custom_call.1} parent=1 // pred_fallthru
      _
    %v25 = vld [vmem:[#allocation2] sm:$0xff]
    %v26 = vld [vmem:[#allocation2 + $0x8] sm:$0xff]
    %v27 = vsub.f32 %v25, 1.0
    %v28 = vsub.f32 %v26, 1.0
    %v29 = vmul.f32 %v27, %v27
    %v30 = vmul.f32 %v28, %v28
    %v31 = vmul.f32 %v29, -0.5
    %v32 = vmul.f32 %v30, -0.5
    %v33 = vmul.f32 %v31, 1.442695
    %v34 = vpow.pop %v33
    %v35 = vmul.f32 %v32, 1.442695
    %v36 = vpow.pop %v35
    %37 = vst [vmem:[#allocation5] sm:$0xff] %v34
    %38 = vst [vmem:[#allocation5 + $0x8] sm:$0xff] %v36
    // Predicated region
    $region10: #{tpu_custom_call.1} parent=1 // pred_check
      _
    $region11: #{tpu_custom_call.1} parent=1 // pred_check_branch
      %40 = sbr.rel (0) target = $region13
    $region12: #{tpu_custom_call.1} parent=1 // pred_region
      %42 = vsyncadd [#allocation4], 0
      %s43 = sshll.u32 [#allocation5], 4
      %s44 = int_to_ptr.vmem [resolvable:$true] %s43
      %s45 = sshll.u32 %s1, 4
      %s46 = int_to_ptr.hbm [resolvable:$true] %s45
      %51 = dma.vmem_to_hbm [thread:$0]  %s44, 256, %s46, [#allocation4], 128, 128, 8
    $region13: #{tpu_custom_call.1} parent=1 // pred_fallthru
      _
    // Predicated region
    $region14: #{tpu_custom_call.1} parent=1 // pred_check
      _
    $region15: #{tpu_custom_call.1} parent=1 // pred_check_branch
      %53 = sbr.rel (0) target = $region17
    $region16: #{tpu_custom_call.1} parent=1 // pred_region
      %55 = dma.done [#allocation4], 256
    $region17: #{tpu_custom_call.1} parent=1 // pred_fallthru
      _
    %56 = vsyncpa [#allocation3], 1
    %57 = vsyncpa [#allocation4], 1

</llo_original>
